<compile_context>
chip_gen: v6e
topology: v6e:2x2x1
jax: 0.10.0
libtpu: 0.0.40
codegen_flags: <defaults>
</compile_context>

<pallas_src>
import jax
import jax.numpy as jnp
from jax.experimental import pallas as pl
from jax.experimental.pallas import tpu as pltpu


def _cutouts_kernel(facs_ref, x_ref, noise_ref, out_ref):
    """One MN-tile per grid step.

    facs_ref  : VMEM (cutn, 1)        per-cutout noise scale
    x_ref     : VMEM (K, tile_mn)     pooling-window positions stacked on axis 0
    noise_ref : VMEM (cutn, tile_mn)  standard-normal noise for this tile
    out_ref   : VMEM (cutn, tile_mn)
    """
    K = x_ref.shape[0]

    # Adaptive avg + max pooling over the K = kh*kw window positions (f32 accumulate).
    x = x_ref[...].astype(jnp.float32)                         # (K, tile_mn)
    pooled = (jnp.sum(x, axis=0, keepdims=True) * (0.5 / K)
              + jnp.max(x, axis=0, keepdims=True) * 0.5)       # (1, tile_mn)

    facs = facs_ref[...].astype(jnp.float32)                   # (cutn, 1)
    noise = noise_ref[...].astype(jnp.float32)                 # (cutn, tile_mn)

    # out[i] = pooled + facs[i] * noise[i]   (vectorized over all cutouts)
    out_ref[...] = (pooled + facs * noise).astype(out_ref.dtype)


def _pick_tile_mn(mn, k, cutn, itemsize, max_tile_mn):
    """Largest multiple of 128 dividing MN, under max_tile_mn and a ~8 MiB
    double-buffered per-step VMEM budget (x, noise, out blocks)."""
    if mn % 128 != 0:
        return mn                      # tiny MN: one full-width block (equals full dim)
    budget = 8 << 20
    per_lane = 2 * (k + 2 * cutn) * itemsize      # 2x for double buffering
    cap = min(max_tile_mn, max(128, budget // per_lane), mn)
    best = 128
    for t in range(128, cap + 1, 128):
        if mn % t == 0:
            best = t
    return best


def make_cutouts(x, facs, noise, cut_size, cutn, *, max_tile_mn=4096):
    """x: (1, C, H, W), facs: (cutn,), noise: (cutn, C, cut_size, cut_size)."""
    B, C, H, W = x.shape
    assert B == 1, "PyTorch module's facs broadcast requires batch == 1"
    assert H % cut_size == 0 and W % cut_size == 0, \
        "adaptive pooling implemented for evenly divisible spatial dims"
    kh, kw = H // cut_size, W // cut_size
    K, MN = kh * kw, C * cut_size * cut_size

    # Window-major view: (K, MN) with MN lane-dense (= one flattened cutout, c-major).
    # TODO(synk): for very large images, fuse this transpose into the producer or
    # drive the K reduction from the natural NCHW layout with an "arbitrary" grid
    # axis + accumulator scratch to avoid the extra HBM round trip of the image.
    xp = x.reshape(C, cut_size, kh, cut_size, kw)
    xp = jnp.transpose(xp, (2, 4, 0, 1, 3)).reshape(K, MN)

    facs2d = facs.astype(x.dtype).reshape(cutn, 1)
    noise2d = noise.astype(x.dtype).reshape(cutn, MN)

    tile_mn = _pick_tile_mn(MN, K, cutn, jnp.dtype(x.dtype).itemsize, max_tile_mn)
    grid = (MN // tile_mn,)

    out = pl.pallas_call(
        _cutouts_kernel,
        out_shape=jax.ShapeDtypeStruct((cutn, MN), x.dtype),
        grid=grid,
        in_specs=[
            pl.BlockSpec((cutn, 1), lambda j: (0, 0)),          # facs (whole, tiny)
            pl.BlockSpec((K, tile_mn), lambda j: (0, j)),        # xp   window slab
            pl.BlockSpec((cutn, tile_mn), lambda j: (0, j)),     # noise tile
        ],
        out_specs=pl.BlockSpec((cutn, tile_mn), lambda j: (0, j)),
        compiler_params=pltpu.CompilerParams(
            dimension_semantics=("parallel",)),                  # split MN across v7x TCs
    )(facs2d, xp, noise2d)

    # TODO(synk): self.augs (kornia ColorJitter/Sharpness/Erasing/Affine/Perspective
    # random pipeline) has no clean Pallas equivalent; treated as identity.
    return out.reshape(cutn, C, cut_size, cut_size)


if __name__ == "__main__":
    cut_size = 8
    cutn = 4
    noise_fac = 0.1
    B, C, H, W = 1, 4, 16, 16

    key = jax.random.PRNGKey(0)
    kx, kf, kn = jax.random.split(key, 3)
    x = jax.random.normal(kx, (B, C, H, W), dtype=jnp.float32)
    facs = jax.random.uniform(kf, (cutn,), minval=0.0, maxval=noise_fac,
                              dtype=jnp.float32)
    noise = jax.random.normal(kn, (cutn, C, cut_size, cut_size), dtype=jnp.float32)

    # Pure-JAX reference: (avg_pool + max_pool)/2, tiled cutn times, + facs*noise.
    kh, kw = H // cut_size, W // cut_size
    xr = x.reshape(B, C, cut_size, kh, cut_size, kw)
    pooled_ref = (xr.mean(axis=(3, 5)) + xr.max(axis=(3, 5))) * 0.5   # (1,C,cs,cs)
    ref = pooled_ref + facs[:, None, None, None] * noise              # (cutn,C,cs,cs)

    # Multi-tile path (MN=256 -> 2 grid steps of 128 lanes) and default-tile path.
    out_tiled = make_cutouts(x, facs, noise, cut_size, cutn, max_tile_mn=128)
    out_full = make_cutouts(x, facs, noise, cut_size, cutn)
    out_tiled = jax.block_until_ready(out_tiled)
    out_full = jax.block_until_ready(out_full)

    assert out_tiled.shape == (cutn, C, cut_size, cut_size)
    assert jnp.allclose(out_tiled, ref, atol=1e-5, rtol=1e-5)
    assert jnp.allclose(out_full, ref, atol=1e-5, rtol=1e-5)
    print("KERNEL_OK")
</pallas_src>

<mosaic_0001>
module attributes {stable_mosaic.version = 11 : i64} {
  func.func @_cutouts_kernel(%arg0: i32, %arg1: memref<4x1xf32, #tpu.memory_space<vmem>>, %arg2: memref<4x128xf32, #tpu.memory_space<vmem>>, %arg3: memref<4x128xf32, #tpu.memory_space<vmem>>, %arg4: memref<4x128xf32, #tpu.memory_space<vmem>>) attributes {dimension_semantics = [#tpu.dimension_semantics<parallel>], iteration_bounds = array<i64: 2>, scalar_prefetch = 0 : i64, scratch_operands = 0 : i64, tpu.core_type = #tpu.core_type<tc>, window_params = [{pipeline_mode = #tpu.pipeline_mode<synchronous>, transform_indices = @transform_0, window_bounds = array<i64: 4, 1>}, {transform_indices = @transform_1, window_bounds = array<i64: 4, 128>}, {transform_indices = @transform_2, window_bounds = array<i64: 4, 128>}, {transform_indices = @transform_3, window_bounds = array<i64: 4, 128>}]} {
    %c0 = arith.constant 0 : index
    %c0_0 = arith.constant 0 : index
    %0 = vector.load %arg2[%c0, %c0_0] : memref<4x128xf32, #tpu.memory_space<vmem>>, vector<4x128xf32>
    %cst = arith.constant dense<0.000000e+00> : vector<128xf32>
    %1 = vector.multi_reduction <add>, %0, %cst [0] : vector<4x128xf32> to vector<128xf32>
    %2 = vector.shape_cast %1 : vector<128xf32> to vector<1x128xf32>
    %cst_1 = arith.constant 1.250000e-01 : f32
    %3 = vector.broadcast %cst_1 : f32 to vector<1x128xf32>
    %4 = arith.mulf %2, %3 : vector<1x128xf32>
    %cst_2 = arith.constant dense<0xFF800000> : vector<128xf32>
    %5 = vector.multi_reduction <maximumf>, %0, %cst_2 [0] : vector<4x128xf32> to vector<128xf32>
    %6 = vector.shape_cast %5 : vector<128xf32> to vector<1x128xf32>
    %cst_3 = arith.constant 5.000000e-01 : f32
    %7 = vector.broadcast %cst_3 : f32 to vector<1x128xf32>
    %8 = arith.mulf %6, %7 : vector<1x128xf32>
    %9 = arith.addf %4, %8 : vector<1x128xf32>
    %c0_4 = arith.constant 0 : index
    %c0_5 = arith.constant 0 : index
    %10 = vector.load %arg1[%c0_4, %c0_5] : memref<4x1xf32, #tpu.memory_space<vmem>>, vector<4x1xf32>
    %c0_6 = arith.constant 0 : index
    %c0_7 = arith.constant 0 : index
    %11 = vector.load %arg3[%c0_6, %c0_7] : memref<4x128xf32, #tpu.memory_space<vmem>>, vector<4x128xf32>
    %12 = vector.broadcast %10 : vector<4x1xf32> to vector<4x128xf32>
    %13 = arith.mulf %12, %11 : vector<4x128xf32>
    %14 = vector.broadcast %9 : vector<1x128xf32> to vector<4x128xf32>
    %15 = arith.addf %14, %13 : vector<4x128xf32>
    %c0_8 = arith.constant 0 : index
    %c0_9 = arith.constant 0 : index
    %16 = vector.load %arg4[%c0_8, %c0_9] : memref<4x128xf32, #tpu.memory_space<vmem>>, vector<4x128xf32>
    tpu.vector_store %arg4[%c0_8, %c0_9], %15 {strides = array<i32>} : memref<4x128xf32, #tpu.memory_space<vmem>>, vector<4x128xf32>,
    return
  }
  func.func @transform_0(%arg0: i32) -> (i32, i32) {
    %c0_i32 = arith.constant 0 : i32
    %c0_i32_0 = arith.constant 0 : i32
    %c0_i32_1 = arith.constant 0 : i32
    return %c0_i32, %c0_i32_0 : i32, i32
  }
  func.func @transform_1(%arg0: i32) -> (i32, i32) {
    %c0_i32 = arith.constant 0 : i32
    %c0_i32_0 = arith.constant 0 : i32
    return %c0_i32, %arg0 : i32, i32
  }
  func.func @transform_2(%arg0: i32) -> (i32, i32) {
    %c0_i32 = arith.constant 0 : i32
    %c0_i32_0 = arith.constant 0 : i32
    return %c0_i32, %arg0 : i32, i32
  }
  func.func @transform_3(%arg0: i32) -> (i32, i32) {
    %c0_i32 = arith.constant 0 : i32
    %c0_i32_0 = arith.constant 0 : i32
    return %c0_i32, %arg0 : i32, i32
  }
}

</mosaic_0001>

<llo_original>
// kernel: tpu_custom_call.1
$region0: #{tpu_custom_call.1}
  #allocation0 [shape = 'u32[]', space=smem, size = 0x4, offset = 0x4, fixed_abs, tag = 'smem constant byte address 0x4 - core index']
  #allocation1 [shape = 'u32[144,128]{1,0:T(1,128)}', space=vmem, size = 0x12000, scoped, tag = 'internal scratch']
  %s0 = inlined_call_operand.vmem [shape: f32[4,1], index: 0, kind: input, shape index: {}]
  %s1 = inlined_call_operand.hbm [shape: f32[4,256], index: 1, kind: input, shape index: {}]
  %s2 = inlined_call_operand.vmem [shape: f32[4,256], index: 2, kind: input, shape index: {}]
  %s3 = inlined_call_operand.hbm [shape: f32[4,256], index: 3, kind: output, shape index: {}]
  %s4 = sld [smem:[#allocation0]]
  $region49: #{tpu_custom_call.1} parent=0
    _
  %s6 = ssub.s32 1, %s4
  %s7 = scalar_select 0, %s6, %s4
  $region1: #{tpu_custom_call.1} parent=0
    #allocation2 [shape = 'u8[4096]{0}', space=vmem, size = 0x1000, scoped, tag = 'input window, operand 1']
    #allocation3 [shape = 's32[2]{0}', space=sflag, size = 0x8, scoped, tag = 'scoped memory for tpu_custom_call.1']
    #allocation4 [shape = 's32[2]{0}', space=sflag, size = 0x8, scoped, tag = 'scoped memory for tpu_custom_call.1']
    #allocation5 [shape = 'u8[4096]{0}', space=vmem, size = 0x1000, scoped, tag = 'output window, operand 0']
    %8 = vsyncpa [#allocation3], 0
    %s9 = scalar_lea.sflag [#allocation3], 1
    %10 = vsyncpa %s9, 0
    %11 = vsyncpa [#allocation4], 0
    %s12 = scalar_lea.sflag [#allocation4], 1
    %13 = vsyncpa %s12, 0
    loop: start=0, step=1, limit=4
    $region2: #{tpu_custom_call.1} parent=1 // loop_pre_header
      _
    $region3: #{tpu_custom_call.1} parent=1 // loop_header
      %s15 = sphi 0, %s19
      %p16 = scmp.ge.s32.totalorder %s15, 4
      %s23 = sphi 0, %s23
      %s25 = sphi 0, %s23
      %s26 = sphi 0, %s25
      %s40 = sphi 0, %s26
      %s46 = sphi 0, %s48
      %s49 = sphi 0, %s46
      %s50 = sphi 0, %s49
      %s66 = sphi 0, %s50
      %s72 = sphi 0, %s74
      %s75 = sphi 0, %s72
      %s76 = sphi 0, %s75
      %s92 = sphi 0, %s76
      %s98 = sphi 0, %s100
      %s101 = sphi 0, %s98
      %s102 = sphi 0, %s101
      %s118 = sphi 0, %s102
    $region4: #{tpu_custom_call.1} parent=1 // loop_header_branch
      %18 = sbr.rel (%p16) target = $region8
    $region5: #{tpu_custom_call.1} parent=1 // loop_body
      %s20 = ssub.s32 %s15, 1
      %s21 = ssub.s32 %s15, 2
      %s22 = sadd.s32 %s15, 1
      %s24 = sadd.s32 %s23, 1
      %p27 = scmp.eq.s32.totalorder %s15, 1
      %p28 = scmp.ne.s32.totalorder %s23, %s25
      %p29 = scmp.eq.s32.totalorder %s15, 0
      %p30 = por %p28, %p29
      %p31 = scmp.ne.s32.totalorder %s23, %s25
      %p32 = scmp.eq.s32.totalorder %s20, 1
      %p33 = por %p31, %p32
      %p34 = scmp.ne.s32.totalorder %s25, %s26
      %p35 = scmp.eq.s32.totalorder %s20, 0
      %p36 = por %p34, %p35
      %p37 = scmp.ne.s32.totalorder %s25, %s26
      %p38 = scmp.eq.s32.totalorder %s21, 1
      %p39 = por %p37, %p38
      %p41 = scmp.ne.s32.totalorder %s26, %s40
      %p42 = scmp.eq.s32.totalorder %s21, 0
      %p43 = por %p41, %p42
      %s44 = ssub.s32 %s15, %s22
      %p45 = scmp.eq.s32.totalorder %s44, 0
      %s47 = sadd.s32 %s46, 1
      %s48 = scalar_select %p45, %s46, %s47
      %p51 = pneg %p45
      %p52 = scmp.eq.s32.totalorder %s15, 1
      %p53 = por %p51, %p52
      %p54 = scmp.ne.s32.totalorder %s46, %s49
      %p55 = scmp.eq.s32.totalorder %s15, 0
      %p56 = por %p54, %p55
      %p57 = scmp.ne.s32.totalorder %s46, %s49
      %p58 = scmp.eq.s32.totalorder %s20, 1
      %p59 = por %p57, %p58
      %p60 = scmp.ne.s32.totalorder %s49, %s50
      %p61 = scmp.eq.s32.totalorder %s20, 0
      %p62 = por %p60, %p61
      %p63 = scmp.ne.s32.totalorder %s49, %s50
      %p64 = scmp.eq.s32.totalorder %s21, 1
      %p65 = por %p63, %p64
      %p67 = scmp.ne.s32.totalorder %s50, %s66
      %p68 = scmp.eq.s32.totalorder %s21, 0
      %p69 = por %p67, %p68
      %s70 = ssub.s32 %s15, %s22
      %p71 = scmp.eq.s32.totalorder %s70, 0
      %s73 = sadd.s32 %s72, 1
      %s74 = scalar_select %p71, %s72, %s73
      %p77 = pneg %p71
      %p78 = scmp.eq.s32.totalorder %s15, 1
      %p79 = por %p77, %p78
      %p80 = scmp.ne.s32.totalorder %s72, %s75
      %p81 = scmp.eq.s32.totalorder %s15, 0
      %p82 = por %p80, %p81
      %p83 = scmp.ne.s32.totalorder %s72, %s75
      %p84 = scmp.eq.s32.totalorder %s20, 1
      %p85 = por %p83, %p84
      %p86 = scmp.ne.s32.totalorder %s75, %s76
      %p87 = scmp.eq.s32.totalorder %s20, 0
      %p88 = por %p86, %p87
      %p89 = scmp.ne.s32.totalorder %s75, %s76
      %p90 = scmp.eq.s32.totalorder %s21, 1
      %p91 = por %p89, %p90
      %p93 = scmp.ne.s32.totalorder %s76, %s92
      %p94 = scmp.eq.s32.totalorder %s21, 0
      %p95 = por %p93, %p94
      %s96 = ssub.s32 %s15, %s22
      %p97 = scmp.eq.s32.totalorder %s96, 0
      %s99 = sadd.s32 %s98, 1
      %s100 = scalar_select %p97, %s98, %s99
      %p103 = pneg %p97
      %p104 = scmp.eq.s32.totalorder %s15, 1
      %p105 = por %p103, %p104
      %p106 = scmp.ne.s32.totalorder %s98, %s101
      %p107 = scmp.eq.s32.totalorder %s15, 0
      %p108 = por %p106, %p107
      %p109 = scmp.ne.s32.totalorder %s98, %s101
      %p110 = scmp.eq.s32.totalorder %s20, 1
      %p111 = por %p109, %p110
      %p112 = scmp.ne.s32.totalorder %s101, %s102
      %p113 = scmp.eq.s32.totalorder %s20, 0
      %p114 = por %p112, %p113
      %p115 = scmp.ne.s32.totalorder %s101, %s102
      %p116 = scmp.eq.s32.totalorder %s21, 1
      %p117 = por %p115, %p116
      %p119 = scmp.ne.s32.totalorder %s102, %s118
      %p120 = scmp.eq.s32.totalorder %s21, 0
      %p121 = por %p119, %p120
      %p122 = scmp.le.s32.totalorder 1, %s15
      %p123 = scmp.lt.s32.totalorder %s15, 3
      %p124 = pnand %p122, %p123
      %p125 = pneg %p124
      // Predicated region
      $region9: #{tpu_custom_call.1} parent=5 // pred_check
        _
      $region10: #{tpu_custom_call.1} parent=5 // pred_check_branch
        %127 = sbr.rel (%p124) target = $region12
      $region11: #{tpu_custom_call.1} parent=5 // pred_region
        %s128 = ssub.s32 %s15, 1
        // Predicated region
        $region13: #{tpu_custom_call.1} parent=11 // pred_check
          %p129 = pneg %p36
        $region14: #{tpu_custom_call.1} parent=11 // pred_check_branch
          %131 = sbr.rel (%p129) target = $region16
        $region15: #{tpu_custom_call.1} parent=11 // pred_region
          _
        $region16: #{tpu_custom_call.1} parent=11 // pred_fallthru
          _
      $region12: #{tpu_custom_call.1} parent=5 // pred_fallthru
        _
      %p132 = scmp.lt.s32.totalorder %s15, 2
      // Predicated region
      $region17: #{tpu_custom_call.1} parent=5 // pred_check
        %p133 = pneg %p132
      $region18: #{tpu_custom_call.1} parent=5 // pred_check_branch
        %135 = sbr.rel (%p133) target = $region20
      $region19: #{tpu_custom_call.1} parent=5 // pred_region
        // Predicated region
        $region21: #{tpu_custom_call.1} parent=19 // pred_check
          %p136 = pneg %p56
        $region22: #{tpu_custom_call.1} parent=19 // pred_check_branch
          %138 = sbr.rel (%p136) target = $region24
        $region23: #{tpu_custom_call.1} parent=19 // pred_region
          %s139 = sand.u32 %s46, 1
          %s140 = scalar_lea.sflag [#allocation3], %s139
          %s141 = sand.u32 %s46, 1
          %s142 = smul.addr %s141, 4
          %s143 = scalar_lea.vmem [#allocation2], %s142
          %s145 = ssub.s32 64, 64
          %146 = vsyncadd %s140, %s145
          %s147 = smul.addr %s15, 64
          %s148 = scalar_lea.hbm %s1, %s147
          %s150 = sshll.u32 %s143, 4
          %s151 = int_to_ptr.vmem [resolvable:$true] %s150
          %153 = dma.hbm_to_vmem [thread:$0]  %s148, 64, %s151, %s140
        $region24: #{tpu_custom_call.1} parent=19 // pred_fallthru
          _
        // Predicated region
        $region25: #{tpu_custom_call.1} parent=19 // pred_check
          %p154 = pneg %p82
        $region26: #{tpu_custom_call.1} parent=19 // pred_check_branch
          %156 = sbr.rel (%p154) target = $region28
        $region27: #{tpu_custom_call.1} parent=19 // pred_region
          %p157 = scmp.lt.s32.totalorder %s15, 1
          %s158 = scalar_select %p157, %s15, 1
          %s159 = smul.addr %s158, 4
          %s160 = scalar_lea.vmem %s2, %s159
        $region28: #{tpu_custom_call.1} parent=19 // pred_fallthru
          _
      $region20: #{tpu_custom_call.1} parent=5 // pred_fallthru
        _
      %p161 = scmp.le.s32.totalorder 1, %s15
      %p162 = scmp.lt.s32.totalorder %s15, 3
      %p163 = pnand %p161, %p162
      %p164 = pneg %p163
      // Predicated region
      $region29: #{tpu_custom_call.1} parent=5 // pred_check
        _
      $region30: #{tpu_custom_call.1} parent=5 // pred_check_branch
        %166 = sbr.rel (%p163) target = $region32
      $region31: #{tpu_custom_call.1} parent=5 // pred_region
        %s167 = ssub.s32 %s15, 1
        %s168 = sand.u32 %s49, 1
        %s169 = scalar_lea.sflag [#allocation3], %s168
        %s170 = sand.u32 %s49, 1
        %s171 = smul.addr %s170, 4
        %s172 = scalar_lea.vmem [#allocation2], %s171
        // Predicated region
        $region33: #{tpu_custom_call.1} parent=31 // pred_check
          %p173 = pneg %p62
        $region34: #{tpu_custom_call.1} parent=31 // pred_check_branch
          %175 = sbr.rel (%p173) target = $region36
        $region35: #{tpu_custom_call.1} parent=31 // pred_region
          %176 = dma.done %s169, 64
        $region36: #{tpu_custom_call.1} parent=31 // pred_fallthru
          _
        %p177 = pneg %p36
        %p178 = pneg %p33
        %s179 = sand.u32 %s49, 1
        %s180 = scalar_lea.sflag [#allocation3], %s179
        %s181 = sand.u32 %s49, 1
        %s182 = smul.addr %s181, 4
        %s183 = scalar_lea.vmem [#allocation2], %s182
        %p184 = pneg %p62
        %p185 = pneg %p59
        %p186 = scmp.lt.s32.totalorder %s20, 1
        %s187 = scalar_select %p186, %s20, 1
        %s188 = smul.addr %s187, 4
        %s189 = scalar_lea.vmem %s2, %s188
        %p190 = pneg %p88
        %p191 = pneg %p85
        %p192 = pneg %p114
        %p193 = pneg %p111
        %s194 = sand.u32 %s101, 1
        %s195 = scalar_lea.sflag [#allocation4], %s194
        %s196 = sand.u32 %s101, 1
        %s197 = smul.addr %s196, 4
        %s198 = scalar_lea.vmem [#allocation5], %s197
        %p199 = scmp.lt.s32.totalorder %s20, 1
        %s200 = scalar_select %p199, %s20, 1
        %s201 = smul.addr %s200, 4
        %s202 = scalar_lea.vmem %s2, %s201
        %v203 = vld [vmem:[%s172] sm:$0xf]
        %vm204 = vcmask 1043456
        %v205 = vsel %vm204, %v203, 0.0
        %v206 = vrot.slane %v205, 4
        %v207 = vadd.f32 %v205, %v206
        %v208 = vrot.slane %v207, 2
        %v209 = vadd.f32 %v207, %v208
        %v210 = vrot.slane %v209, 1
        %v211 = vadd.f32 %v209, %v210
        %v212 = vmul.f32 %v211, 0.125
        %v213 = vsel %vm204, %v203, -inf
        %v214 = vrot.slane %v213, 4
        %v215 = vmax.f32 %v213, %v214
        %v216 = vrot.slane %v215, 2
        %v217 = vmax.f32 %v215, %v216
        %v218 = vrot.slane %v217, 1
        %v219 = vmax.f32 %v217, %v218
        %v220 = vmul.f32 %v219, 0.5
        %v221 = vadd.f32 %v212, %v220
        %v222 = vld [vmem:[%s0] sm:$0xf]
        %v223 = vld [vmem:[%s202] sm:$0xf]
        %225 = vset.pattern.permute.xlu0 0
        %226 = vperm.xlu0 %225, %v222
        %v227 = vpop.permute.xlu0 %226
        %v229 = vmul.f32 %v227, %v223
        %v230 = vadd.f32 %v221, %v229
        %231 = vst [vmem:[%s198] sm:$0xf] %v230
        %s232 = sand.u32 %s101, 1
        %s233 = scalar_lea.sflag [#allocation4], %s232
        %s234 = sand.u32 %s101, 1
        %s235 = smul.addr %s234, 4
        %s236 = scalar_lea.vmem [#allocation5], %s235
        // Predicated region
        $region37: #{tpu_custom_call.1} parent=31 // pred_check
          %p237 = pneg %p111
        $region38: #{tpu_custom_call.1} parent=31 // pred_check_branch
          %239 = sbr.rel (%p237) target = $region40
        $region39: #{tpu_custom_call.1} parent=31 // pred_region
          %s241 = ssub.s32 64, 64
          %242 = vsyncadd %s233, %s241
          %s243 = smul.addr %s20, 64
          %s244 = scalar_lea.hbm %s3, %s243
          %s246 = sshll.u32 %s236, 4
          %s247 = int_to_ptr.vmem [resolvable:$true] %s246
          %249 = dma.vmem_to_hbm [thread:$0]  %s247, 64, %s244, %s233
        $region40: #{tpu_custom_call.1} parent=31 // pred_fallthru
          _
      $region32: #{tpu_custom_call.1} parent=5 // pred_fallthru
        _
      %p250 = scmp.le.s32.totalorder 2, %s15
      // Predicated region
      $region41: #{tpu_custom_call.1} parent=5 // pred_check
        %p251 = pneg %p250
      $region42: #{tpu_custom_call.1} parent=5 // pred_check_branch
        %253 = sbr.rel (%p251) target = $region44
      $region43: #{tpu_custom_call.1} parent=5 // pred_region
        %s254 = ssub.s32 %s15, 2
        // Predicated region
        $region45: #{tpu_custom_call.1} parent=43 // pred_check
          %p255 = pneg %p117
        $region46: #{tpu_custom_call.1} parent=43 // pred_check_branch
          %257 = sbr.rel (%p255) target = $region48
        $region47: #{tpu_custom_call.1} parent=43 // pred_region
          %s258 = sand.u32 %s102, 1
          %s259 = scalar_lea.sflag [#allocation4], %s258
          %s260 = sand.u32 %s102, 1
          %s261 = smul.addr %s260, 4
          %s262 = scalar_lea.vmem [#allocation5], %s261
          %263 = dma.done %s259, 64
        $region48: #{tpu_custom_call.1} parent=43 // pred_fallthru
          _
      $region44: #{tpu_custom_call.1} parent=5 // pred_fallthru
        _
    $region6: #{tpu_custom_call.1} parent=1 // loop_footer
      %s19 = sadd.s32 1, %s15
    $region7: #{tpu_custom_call.1} parent=1 // loop_footer_branch
      %14 = sbr.rel target = $region3
    $region8: #{tpu_custom_call.1} parent=1 // loop_exit
      _
    %264 = vsyncpa [#allocation3], 1
    %s265 = scalar_lea.sflag [#allocation3], 1
    %266 = vsyncpa %s265, 1
    %267 = vsyncpa [#allocation4], 1
    %s268 = scalar_lea.sflag [#allocation4], 1
    %269 = vsyncpa %s268, 1

</llo_original>
